<compile_context>
chip_gen: v5e
topology: v5e:2x2
jax: 0.10.0
libtpu: 0.0.40
codegen_flags: <defaults>
</compile_context>

<pallas_src>
import functools

import jax
import jax.numpy as jnp
import numpy as np
from jax.experimental import pallas as pl
from jax.experimental.pallas import tpu as pltpu

LANE = 128
ROW_ALIGN = 16          # covers bf16 (16, 128) sublane packing; harmless for f32


def _round_up(x, m):
    return (x + m - 1) // m * m


def _cdiv(a, b):
    return -(-a // b)


# ----------------------------- Pallas kernel ------------------------------

def _qnet_kernel(xbt_ref, xrow_ref, w1bt_ref, w1row_ref, b1a_ref,
                 w2_ref, b2_ref, w3_ref, b3_ref, o_ref):
    """One (tm, .) row tile of one agent: split-fc1 -> lrelu -> fc2 -> lrelu -> fc3."""

    def lrelu(v):                       # F.leaky_relu default slope = 0.01
        return jnp.where(v > 0, v, 0.01 * v)

    x_bt = xbt_ref[...]                 # (tm, Dbt)   shared per-(b,t) features
    x_row = xrow_ref[0]                 # (tm, Drow)  this agent's per-row features

    # fc1 = shared matmul + per-row matmul + per-agent bias (f32 accumulation)
    h = jnp.dot(x_bt, w1bt_ref[...], preferred_element_type=jnp.float32)
    h = h + jnp.dot(x_row, w1row_ref[0], preferred_element_type=jnp.float32)
    h1 = lrelu(h + b1a_ref[0])          # (tm, Hp) f32

    # fc2
    w2 = w2_ref[...]
    h1 = h1.astype(w2.dtype)            # feed the MXU in the operand dtype
    h2 = lrelu(jnp.dot(h1, w2, preferred_element_type=jnp.float32) + b2_ref[...])

    # fc3 (no activation): 128-lane matmul, compact (narrow) store
    w3 = w3_ref[...]
    h2 = h2.astype(w3.dtype)
    q = jnp.dot(h2, w3, preferred_element_type=jnp.float32) + b3_ref[...]
    o_ref[0] = q[:, :o_ref.shape[-1]].astype(o_ref.dtype)


def _qnet_mlp(x_bt, x_row, w1_bt, w1_row_pa, b1_agent, w2, b2, w3, b3,
              *, tm, o_store):
    """Fused split-fc1 3-layer MLP.

    x_bt      : (BTp, Dbt)        shared per-(b,t) features
    x_row     : (A, BTp, Drow)    per-row features, agent-major
    w1_bt     : (Dbt, Hp)
    w1_row_pa : (A, Drow, Hp)     per-agent fc1 weights for the row features
    b1_agent  : (A, 1, Hp)        b1 + W1_agent_id[a]
    w2,b2,w3,b3 : padded fc2 / fc3 params (w3 is 128-lane wide; the result is
                  sliced down to o_store lanes in-kernel before the store)
    returns   : (A, BTp, o_store) float32
    """
    BTp, Dbt = x_bt.shape
    A, _, Drow = x_row.shape
    Hp = w2.shape[0]
    Op_mm = w3.shape[1]
    assert BTp % tm == 0

    nj = BTp // tm
    grid = (nj, A)                       # agent axis innermost -> x_bt reused

    flops = 2 * A * BTp * (Dbt * Hp + Drow * Hp + Hp * Hp + Hp * Op_mm)
    bytes_accessed = (
        x_bt.size * x_bt.dtype.itemsize
        + x_row.size * x_row.dtype.itemsize
        + A * BTp * o_store * 4
        + sum(int(a.size) * a.dtype.itemsize
              for a in (w1_bt, w1_row_pa, b1_agent, w2, b2, w3, b3)))

    return pl.pallas_call(
        _qnet_kernel,
        out_shape=jax.ShapeDtypeStruct((A, BTp, o_store), jnp.float32),
        grid=grid,
        in_specs=[
            # shared (b,t) features: block index independent of the agent axis,
            # so the pipeline DMAs it once per BT tile and reuses it A times.
            pl.BlockSpec((tm, Dbt), lambda j, a: (j, 0)),
            # per-row features, agent-major (contiguous per-agent tiles in HBM)
            pl.BlockSpec((1, tm, Drow), lambda j, a: (a, j, 0)),
            # weights / biases: tiny, VMEM-resident (constant / per-agent index)
            pl.BlockSpec(w1_bt.shape, lambda j, a: (0, 0)),
            pl.BlockSpec((1, Drow, Hp), lambda j, a: (a, 0, 0)),
            pl.BlockSpec((1, 1, Hp), lambda j, a: (a, 0, 0)),
            pl.BlockSpec(w2.shape, lambda j, a: (0, 0)),
            pl.BlockSpec(b2.shape, lambda j, a: (0, 0)),
            pl.BlockSpec(w3.shape, lambda j, a: (0, 0)),
            pl.BlockSpec(b3.shape, lambda j, a: (0, 0)),
        ],
        out_specs=pl.BlockSpec((1, tm, o_store), lambda j, a: (a, j, 0)),
        compiler_params=pltpu.CompilerParams(
            dimension_semantics=("parallel", "arbitrary")),   # BT axis -> 2 TCs on v7x
        cost_estimate=pl.CostEstimate(flops=int(flops), transcendentals=0,
                                      bytes_accessed=int(bytes_accessed)),
    )(x_bt, x_row, w1_bt, w1_row_pa, b1_agent, w2, b2, w3, b3)


# ------------------------------ Qnet wrapper ------------------------------

def qnet_forward(params, states, obs, actions_onehot, n_agents, n_actions,
                 use_bf16=False, tm=2048):
    """Forward pass equivalent to Qnet.forward(batch, n_agents, n_actions, t=None)."""
    # TODO(synk): the t=int single-timestep branch of _build_inputs is not
    # implemented (only the full-sequence t=None path used in training).
    bs, max_t, state_dim = states.shape
    obs_dim = obs.shape[-1]
    A, n_act = n_agents, n_actions
    BT = bs * max_t
    H = params['w1'].shape[1]
    O = params['w3'].shape[1]

    # ---- split W1 by feature group (order matches _build_inputs' concat) ----
    w1 = params['w1']
    ofs = 0
    w1_s = w1[ofs:ofs + state_dim];   ofs += state_dim
    w1_o = w1[ofs:ofs + obs_dim];     ofs += obs_dim
    w1_a = w1[ofs:ofs + A * n_act];   ofs += A * n_act
    w1_l = w1[ofs:ofs + A * n_act];   ofs += A * n_act
    w1_id = w1[ofs:ofs + A];          ofs += A

    # ---- compact per-(b,t) slab: [states | all actions | last actions] ----
    act_flat = actions_onehot.reshape(bs, max_t, A * n_act)
    last_flat = jnp.concatenate(
        [jnp.zeros_like(act_flat[:, :1]), act_flat[:, :-1]], axis=1)
    x_bt = jnp.concatenate([states, act_flat, last_flat],
                           axis=-1).reshape(BT, -1).astype(jnp.float32)
    w1_bt = jnp.concatenate([w1_s, w1_a, w1_l], axis=0)          # (Dbt, H)

    # ---- compact per-row slab (agent-major): [own obs | own actions] ----
    obs_am = jnp.transpose(obs, (2, 0, 1, 3)).reshape(A, BT, obs_dim)
    act_am = jnp.transpose(actions_onehot, (2, 0, 1, 3)).reshape(A, BT, n_act)
    x_row = jnp.concatenate([obs_am, act_am], axis=-1).astype(jnp.float32)

    # per-agent fc1 weights for the row features: [W1_obs ; -W1_act_block[a]]
    # (the minus sign implements "own actions masked out of the joint action").
    w1_a_blocks = w1_a.reshape(A, n_act, H)
    w1_row_pa = jnp.concatenate(
        [jnp.broadcast_to(w1_o[None], (A, obs_dim, H)), -w1_a_blocks], axis=1)

    # per-agent fc1 bias: b1 + W1_agent_id[a]
    b1_agent = (params['b1'] + w1_id).reshape(A, 1, H)

    # ---- padded, layout-friendly sizes ----
    Dbt, Drow = x_bt.shape[1], x_row.shape[2]
    Dbt_p = _round_up(Dbt, 16)
    Drow_p = _round_up(Drow, 16)
    Hp = _round_up(H, LANE)
    Op_mm = _round_up(O, LANE)       # fc3 matmul stays 128 lanes wide (cheap)
    Op_st = _round_up(O, 8)          # compact HBM writeback width

    # rows-per-step: bounded padding; force >= 2 BT tiles when worth sharding (v7x)
    n_steps = max(1, _cdiv(BT, tm))
    if n_steps == 1 and BT >= 512:
        n_steps = 2
    tm_eff = _round_up(_cdiv(BT, n_steps), ROW_ALIGN)
    BTp = _round_up(BT, tm_eff)

    # ---- zero-pad (keeps padded lanes exactly zero through the MLP) ----
    x_bt = jnp.pad(x_bt, ((0, BTp - BT), (0, Dbt_p - Dbt)))
    x_row = jnp.pad(x_row, ((0, 0), (0, BTp - BT), (0, Drow_p - Drow)))
    w1_bt = jnp.pad(w1_bt, ((0, Dbt_p - Dbt), (0, Hp - H)))
    w1_row_pa = jnp.pad(w1_row_pa, ((0, 0), (0, Drow_p - Drow), (0, Hp - H)))
    b1_agent = jnp.pad(b1_agent, ((0, 0), (0, 0), (0, Hp - H)))
    w2 = jnp.pad(params['w2'], ((0, Hp - H), (0, Hp - H)))
    b2 = jnp.pad(params['b2'], ((0, 0), (0, Hp - H)))
    w3 = jnp.pad(params['w3'], ((0, Hp - H), (0, Op_mm - O)))
    b3 = jnp.pad(params['b3'], ((0, 0), (0, Op_mm - O)))

    if use_bf16:
        # bf16 MXU operands (halves X HBM traffic; helps v5e most);
        # biases, accumulation and the output stay f32.
        x_bt = x_bt.astype(jnp.bfloat16)
        x_row = x_row.astype(jnp.bfloat16)
        w1_bt = w1_bt.astype(jnp.bfloat16)
        w1_row_pa = w1_row_pa.astype(jnp.bfloat16)
        w2 = w2.astype(jnp.bfloat16)
        w3 = w3.astype(jnp.bfloat16)

    q_am = _qnet_mlp(x_bt, x_row, w1_bt, w1_row_pa, b1_agent,
                     w2, b2, w3, b3, tm=tm_eff, o_store=Op_st)

    q = q_am[:, :BT, :O]                                   # (A, BT, O)
    return jnp.transpose(q, (1, 0, 2)).reshape(bs, max_t, A, O)


# ------------------- pure-JAX reference (mirrors PyTorch) ------------------

def build_inputs(states, obs, actions_onehot, n_agents, n_actions):
    bs, max_t, state_dim = states.shape
    inputs = []
    inputs.append(jnp.broadcast_to(states[:, :, None, :],
                                   (bs, max_t, n_agents, state_dim)))
    inputs.append(obs)

    actions = actions_onehot.reshape(bs, max_t, 1, n_agents * n_actions)
    actions = jnp.broadcast_to(actions,
                               (bs, max_t, n_agents, n_agents * n_actions))
    agent_mask = 1.0 - jnp.eye(n_agents, dtype=jnp.float32)
    agent_mask = jnp.repeat(agent_mask.reshape(-1, 1), n_actions, axis=1)
    agent_mask = agent_mask.reshape(n_agents, n_agents * n_actions)
    inputs.append(actions * agent_mask[None, None])

    last = jnp.concatenate(
        [jnp.zeros_like(actions_onehot[:, 0:1]), actions_onehot[:, :-1]], axis=1)
    last = last.reshape(bs, max_t, 1, n_agents * n_actions)
    last = jnp.broadcast_to(last, (bs, max_t, n_agents, n_agents * n_actions))
    inputs.append(last)

    eye = jnp.eye(n_agents, dtype=jnp.float32)
    inputs.append(jnp.broadcast_to(eye[None, None],
                                   (bs, max_t, n_agents, n_agents)))
    return jnp.concatenate(
        [x.reshape(bs, max_t, n_agents, -1) for x in inputs], axis=-1)


def qnet_reference(params, states, obs, actions_onehot, n_agents, n_actions):
    inputs = build_inputs(states, obs, actions_onehot, n_agents, n_actions)

    def lrelu(v):
        return jnp.where(v > 0, v, 0.01 * v)

    h = lrelu(inputs @ params['w1'] + params['b1'][0])
    h = lrelu(h @ params['w2'] + params['b2'][0])
    return h @ params['w3'] + params['b3'][0]


def init_qnet_params(key, input_size, hidden_size, output_size):
    ks = jax.random.split(key, 6)

    def lin(kw, kb, fan_in, fan_out):
        bound = 1.0 / np.sqrt(fan_in)
        w = jax.random.uniform(kw, (fan_in, fan_out), jnp.float32, -bound, bound)
        b = jax.random.uniform(kb, (1, fan_out), jnp.float32, -bound, bound)
        return w, b

    w1, b1 = lin(ks[0], ks[1], input_size, hidden_size)
    w2, b2 = lin(ks[2], ks[3], hidden_size, hidden_size)
    w3, b3 = lin(ks[4], ks[5], hidden_size, output_size)
    return dict(w1=w1, b1=b1, w2=w2, b2=b2, w3=w3, b3=b3)


# --------------------------------- main -----------------------------------

if __name__ == "__main__":
    key = jax.random.PRNGKey(0)
    k_state, k_obs, k_act, k_param = jax.random.split(key, 4)

    # small, consistent shapes
    bs, max_t = 2, 8
    n_agents, n_actions = 3, 5
    state_dim, obs_dim = 12, 10
    hidden_size = 32
    output_size = n_actions
    input_size = state_dim + obs_dim + 2 * n_agents * n_actions + n_agents

    states = jax.random.normal(k_state, (bs, max_t, state_dim), jnp.float32)
    obs = jax.random.normal(k_obs, (bs, max_t, n_agents, obs_dim), jnp.float32)
    act_idx = jax.random.randint(k_act, (bs, max_t, n_agents), 0, n_actions)
    actions_onehot = jax.nn.one_hot(act_idx, n_actions, dtype=jnp.float32)

    params = init_qnet_params(k_param, input_size, hidden_size, output_size)

    fwd = jax.jit(functools.partial(qnet_forward,
                                    n_agents=n_agents, n_actions=n_actions),
                  static_argnames=("use_bf16", "tm"))

    # --- f32 path: exact semantics of the PyTorch module ---
    q = jax.block_until_ready(fwd(params, states, obs, actions_onehot,
                                  use_bf16=False))
    q_ref = qnet_reference(params, states, obs, actions_onehot,
                           n_agents, n_actions)
    assert q.shape == (bs, max_t, n_agents, output_size)
    np.testing.assert_allclose(np.asarray(q), np.asarray(q_ref),
                               rtol=1e-4, atol=1e-4)

    # --- bf16 operand path (throughput option), sanity check vs f32 ref ---
    q_bf16 = jax.block_until_ready(fwd(params, states, obs, actions_onehot,
                                       use_bf16=True))
    assert q_bf16.shape == (bs, max_t, n_agents, output_size)
    np.testing.assert_allclose(np.asarray(q_bf16), np.asarray(q_ref),
                               rtol=5e-2, atol=5e-2)

    print("KERNEL_OK")
</pallas_src>

<mosaic_0001>
module attributes {stable_mosaic.version = 11 : i64} {
  func.func @_qnet_kernel(%arg0: i32, %arg1: i32, %arg2: memref<16x48xf32, #tpu.memory_space<vmem>>, %arg3: memref<1x16x16xf32, #tpu.memory_space<vmem>>, %arg4: memref<48x128xf32, #tpu.memory_space<vmem>>, %arg5: memref<1x16x128xf32, #tpu.memory_space<vmem>>, %arg6: memref<1x1x128xf32, #tpu.memory_space<vmem>>, %arg7: memref<128x128xf32, #tpu.memory_space<vmem>>, %arg8: memref<1x128xf32, #tpu.memory_space<vmem>>, %arg9: memref<128x128xf32, #tpu.memory_space<vmem>>, %arg10: memref<1x128xf32, #tpu.memory_space<vmem>>, %arg11: memref<1x16x8xf32, #tpu.memory_space<vmem>>) attributes {dimension_semantics = [#tpu.dimension_semantics<parallel>, #tpu.dimension_semantics<arbitrary>], iteration_bounds = array<i64: 1, 3>, scalar_prefetch = 0 : i64, scratch_operands = 0 : i64, tpu.core_type = #tpu.core_type<tc>, window_params = [{transform_indices = @transform_0, window_bounds = array<i64: 16, 48>}, {transform_indices = @transform_1, window_bounds = array<i64: 1, 16, 16>}, {pipeline_mode = #tpu.pipeline_mode<synchronous>, transform_indices = @transform_2, window_bounds = array<i64: 48, 128>}, {transform_indices = @transform_3, window_bounds = array<i64: 1, 16, 128>}, {transform_indices = @transform_4, window_bounds = array<i64: 1, 1, 128>}, {pipeline_mode = #tpu.pipeline_mode<synchronous>, transform_indices = @transform_5, window_bounds = array<i64: 128, 128>}, {pipeline_mode = #tpu.pipeline_mode<synchronous>, transform_indices = @transform_6, window_bounds = array<i64: 1, 128>}, {pipeline_mode = #tpu.pipeline_mode<synchronous>, transform_indices = @transform_7, window_bounds = array<i64: 128, 128>}, {pipeline_mode = #tpu.pipeline_mode<synchronous>, transform_indices = @transform_8, window_bounds = array<i64: 1, 128>}, {transform_indices = @transform_9, window_bounds = array<i64: 1, 16, 8>}]} {
    %c0 = arith.constant 0 : index
    %c0_0 = arith.constant 0 : index
    %0 = vector.load %arg2[%c0, %c0_0] : memref<16x48xf32, #tpu.memory_space<vmem>>, vector<16x48xf32>
    %c0_1 = arith.constant 0 : index
    %c0_2 = arith.constant 0 : index
    %c0_3 = arith.constant 0 : index
    %1 = vector.load %arg3[%c0_1, %c0_2, %c0_3] : memref<1x16x16xf32, #tpu.memory_space<vmem>>, vector<1x16x16xf32>
    %2 = vector.shape_cast %1 : vector<1x16x16xf32> to vector<16x16xf32>
    %c0_4 = arith.constant 0 : index
    %c0_5 = arith.constant 0 : index
    %3 = vector.load %arg4[%c0_4, %c0_5] : memref<48x128xf32, #tpu.memory_space<vmem>>, vector<48x128xf32>
    %cst = arith.constant dense<0.000000e+00> : vector<16x128xf32>
    %4 = tpu.matmul %0, %3, %cst {dimension_numbers = #tpu.dot_dimension_numbers<[1], [0], [0], [1], [0, 0, 1, 1], [], []>} : vector<16x48xf32>, vector<48x128xf32>, vector<16x128xf32> -> vector<16x128xf32>
    %c0_6 = arith.constant 0 : index
    %c0_7 = arith.constant 0 : index
    %c0_8 = arith.constant 0 : index
    %5 = vector.load %arg5[%c0_6, %c0_7, %c0_8] : memref<1x16x128xf32, #tpu.memory_space<vmem>>, vector<1x16x128xf32>
    %6 = vector.shape_cast %5 : vector<1x16x128xf32> to vector<16x128xf32>
    %cst_9 = arith.constant dense<0.000000e+00> : vector<16x128xf32>
    %7 = tpu.matmul %2, %6, %cst_9 {dimension_numbers = #tpu.dot_dimension_numbers<[1], [0], [0], [1], [0, 0, 1, 1], [], []>} : vector<16x16xf32>, vector<16x128xf32>, vector<16x128xf32> -> vector<16x128xf32>
    %8 = arith.addf %4, %7 : vector<16x128xf32>
    %c0_10 = arith.constant 0 : index
    %c0_11 = arith.constant 0 : index
    %c0_12 = arith.constant 0 : index
    %9 = vector.load %arg6[%c0_10, %c0_11, %c0_12] : memref<1x1x128xf32, #tpu.memory_space<vmem>>, vector<1x1x128xf32>
    %10 = vector.shape_cast %9 : vector<1x1x128xf32> to vector<1x128xf32>
    %11 = vector.broadcast %10 : vector<1x128xf32> to vector<16x128xf32>
    %12 = arith.addf %8, %11 : vector<16x128xf32>
    %cst_13 = arith.constant 0.000000e+00 : f32
    %13 = vector.broadcast %cst_13 : f32 to vector<16x128xf32>
    %14 = arith.cmpf ogt, %12, %13 : vector<16x128xf32>
    %cst_14 = arith.constant 0.00999999977 : f32
    %15 = vector.broadcast %cst_14 : f32 to vector<16x128xf32>
    %16 = arith.mulf %15, %12 : vector<16x128xf32>
    %17 = arith.select %14, %12, %16 : vector<16x128xi1>, vector<16x128xf32>
    %c0_15 = arith.constant 0 : index
    %c0_16 = arith.constant 0 : index
    %18 = vector.load %arg7[%c0_15, %c0_16] : memref<128x128xf32, #tpu.memory_space<vmem>>, vector<128x128xf32>
    %cst_17 = arith.constant dense<0.000000e+00> : vector<16x128xf32>
    %19 = tpu.matmul %17, %18, %cst_17 {dimension_numbers = #tpu.dot_dimension_numbers<[1], [0], [0], [1], [0, 0, 1, 1], [], []>} : vector<16x128xf32>, vector<128x128xf32>, vector<16x128xf32> -> vector<16x128xf32>
    %c0_18 = arith.constant 0 : index
    %c0_19 = arith.constant 0 : index
    %20 = vector.load %arg8[%c0_18, %c0_19] : memref<1x128xf32, #tpu.memory_space<vmem>>, vector<1x128xf32>
    %21 = vector.broadcast %20 : vector<1x128xf32> to vector<16x128xf32>
    %22 = arith.addf %19, %21 : vector<16x128xf32>
    %cst_20 = arith.constant 0.000000e+00 : f32
    %23 = vector.broadcast %cst_20 : f32 to vector<16x128xf32>
    %24 = arith.cmpf ogt, %22, %23 : vector<16x128xf32>
    %cst_21 = arith.constant 0.00999999977 : f32
    %25 = vector.broadcast %cst_21 : f32 to vector<16x128xf32>
    %26 = arith.mulf %25, %22 : vector<16x128xf32>
    %27 = arith.select %24, %22, %26 : vector<16x128xi1>, vector<16x128xf32>
    %c0_22 = arith.constant 0 : index
    %c0_23 = arith.constant 0 : index
    %28 = vector.load %arg9[%c0_22, %c0_23] : memref<128x128xf32, #tpu.memory_space<vmem>>, vector<128x128xf32>
    %cst_24 = arith.constant dense<0.000000e+00> : vector<16x128xf32>
    %29 = tpu.matmul %27, %28, %cst_24 {dimension_numbers = #tpu.dot_dimension_numbers<[1], [0], [0], [1], [0, 0, 1, 1], [], []>} : vector<16x128xf32>, vector<128x128xf32>, vector<16x128xf32> -> vector<16x128xf32>
    %c0_25 = arith.constant 0 : index
    %c0_26 = arith.constant 0 : index
    %30 = vector.load %arg10[%c0_25, %c0_26] : memref<1x128xf32, #tpu.memory_space<vmem>>, vector<1x128xf32>
    %31 = vector.broadcast %30 : vector<1x128xf32> to vector<16x128xf32>
    %32 = arith.addf %29, %31 : vector<16x128xf32>
    %33 = vector.extract_strided_slice %32 {offsets = [0, 0], sizes = [16, 8], strides = [1, 1]} : vector<16x128xf32> to vector<16x8xf32>
    %c0_27 = arith.constant 0 : index
    %c0_28 = arith.constant 0 : index
    %c0_29 = arith.constant 0 : index
    %34 = vector.load %arg11[%c0_27, %c0_28, %c0_29] : memref<1x16x8xf32, #tpu.memory_space<vmem>>, vector<1x16x8xf32>
    %35 = vector.shape_cast %34 : vector<1x16x8xf32> to vector<16x8xf32>
    %36 = vector.shape_cast %33 : vector<16x8xf32> to vector<1x16x8xf32>
    tpu.vector_store %arg11[%c0_27, %c0_28, %c0_29], %36 {strides = array<i32>} : memref<1x16x8xf32, #tpu.memory_space<vmem>>, vector<1x16x8xf32>,
    return
  }
  func.func @transform_0(%arg0: i32, %arg1: i32) -> (i32, i32) {
    %c0_i32 = arith.constant 0 : i32
    %c0_i32_0 = arith.constant 0 : i32
    return %arg0, %c0_i32 : i32, i32
  }
  func.func @transform_1(%arg0: i32, %arg1: i32) -> (i32, i32, i32) {
    %c0_i32 = arith.constant 0 : i32
    %c0_i32_0 = arith.constant 0 : i32
    return %arg1, %arg0, %c0_i32 : i32, i32, i32
  }
  func.func @transform_2(%arg0: i32, %arg1: i32) -> (i32, i32) {
    %c0_i32 = arith.constant 0 : i32
    %c0_i32_0 = arith.constant 0 : i32
    %c0_i32_1 = arith.constant 0 : i32
    return %c0_i32, %c0_i32_0 : i32, i32
  }
  func.func @transform_3(%arg0: i32, %arg1: i32) -> (i32, i32, i32) {
    %c0_i32 = arith.constant 0 : i32
    %c0_i32_0 = arith.constant 0 : i32
    %c0_i32_1 = arith.constant 0 : i32
    return %arg1, %c0_i32, %c0_i32_0 : i32, i32, i32
  }
  func.func @transform_4(%arg0: i32, %arg1: i32) -> (i32, i32, i32) {
    %c0_i32 = arith.constant 0 : i32
    %c0_i32_0 = arith.constant 0 : i32
    %c0_i32_1 = arith.constant 0 : i32
    return %arg1, %c0_i32, %c0_i32_0 : i32, i32, i32
  }
  func.func @transform_5(%arg0: i32, %arg1: i32) -> (i32, i32) {
    %c0_i32 = arith.constant 0 : i32
    %c0_i32_0 = arith.constant 0 : i32
    %c0_i32_1 = arith.constant 0 : i32
    return %c0_i32, %c0_i32_0 : i32, i32
  }
  func.func @transform_6(%arg0: i32, %arg1: i32) -> (i32, i32) {
    %c0_i32 = arith.constant 0 : i32
    %c0_i32_0 = arith.constant 0 : i32
    %c0_i32_1 = arith.constant 0 : i32
    return %c0_i32, %c0_i32_0 : i32, i32
  }
  func.func @transform_7(%arg0: i32, %arg1: i32) -> (i32, i32) {
    %c0_i32 = arith.constant 0 : i32
    %c0_i32_0 = arith.constant 0 : i32
    %c0_i32_1 = arith.constant 0 : i32
    return %c0_i32, %c0_i32_0 : i32, i32
  }
  func.func @transform_8(%arg0: i32, %arg1: i32) -> (i32, i32) {
    %c0_i32 = arith.constant 0 : i32
    %c0_i32_0 = arith.constant 0 : i32
    %c0_i32_1 = arith.constant 0 : i32
    return %c0_i32, %c0_i32_0 : i32, i32
  }
  func.func @transform_9(%arg0: i32, %arg1: i32) -> (i32, i32, i32) {
    %c0_i32 = arith.constant 0 : i32
    %c0_i32_0 = arith.constant 0 : i32
    return %arg1, %arg0, %c0_i32 : i32, i32, i32
  }
}

</mosaic_0001>

<llo_original>
// kernel: qnet_forward.1
$region0: #{qnet_forward.1}
  #allocation0 [shape = 'u32[]', space=smem, size = 0x4, offset = 0x4, fixed_abs, tag = 'smem constant byte address 0x4 - core index']
  #allocation1 [shape = 'u32[72,128]{1,0:T(1,128)}', space=vmem, size = 0x9000, scoped, tag = 'internal scratch']
  %s0 = inlined_call_operand.vmem [shape: f32[16,48], index: 0, kind: input, shape index: {}]
  %s1 = inlined_call_operand.vmem [shape: f32[3,16,16], index: 1, kind: input, shape index: {}]
  %s2 = inlined_call_operand.vmem [shape: f32[48,128], index: 2, kind: input, shape index: {}]
  %s3 = inlined_call_operand.vmem [shape: f32[3,16,128], index: 3, kind: input, shape index: {}]
  %s4 = inlined_call_operand.vmem [shape: f32[3,1,128], index: 4, kind: input, shape index: {}]
  %s5 = inlined_call_operand.vmem [shape: f32[128,128], index: 5, kind: input, shape index: {}]
  %s6 = inlined_call_operand.vmem [shape: f32[1,128], index: 6, kind: input, shape index: {}]
  %s7 = inlined_call_operand.vmem [shape: f32[128,128], index: 7, kind: input, shape index: {}]
  %s8 = inlined_call_operand.vmem [shape: f32[1,128], index: 8, kind: input, shape index: {}]
  %s9 = inlined_call_operand.vmem [shape: f32[3,16,8], index: 9, kind: output, shape index: {}]
  %s10 = sld [smem:[#allocation0]]
  $region69: #{qnet_forward.1} parent=0
    _
  %s12 = ssub.s32 1, %s10
  %s13 = scalar_select 0, %s12, %s10
  loop: start=0, step=1, limit=5
  $region2: #{qnet_forward.1} parent=0 // loop_pre_header
    _
  $region3: #{qnet_forward.1} parent=0 // loop_header
    %s15 = sphi 0, %s19
    %p16 = scmp.ge.s32.totalorder %s15, 5
    %s22 = sphi 0, %s34
    %s23 = sphi 0, %s30
    %s24 = sphi 0, %s22
    %s25 = sphi 0, %s23
    %s26 = sphi 0, %s24
    %s27 = sphi 0, %s25
    %s37 = sphi 0, %s39
    %s40 = sphi 0, %s37
    %s41 = sphi 0, %s40
    %s57 = sphi 0, %s41
    %s65 = sphi 0, %s67
    %s68 = sphi 0, %s65
    %s69 = sphi 0, %s68
    %s85 = sphi 0, %s69
    %s89 = sphi 0, %s89
    %s91 = sphi 0, %s89
    %s92 = sphi 0, %s91
    %s106 = sphi 0, %s92
    %s112 = sphi 0, %s114
    %s115 = sphi 0, %s112
    %s116 = sphi 0, %s115
    %s132 = sphi 0, %s116
    %s138 = sphi 0, %s140
    %s141 = sphi 0, %s138
    %s142 = sphi 0, %s141
    %s158 = sphi 0, %s142
    %s162 = sphi 0, %s162
    %s164 = sphi 0, %s162
    %s165 = sphi 0, %s164
    %s179 = sphi 0, %s165
    %s183 = sphi 0, %s183
    %s185 = sphi 0, %s183
    %s186 = sphi 0, %s185
    %s200 = sphi 0, %s186
    %s204 = sphi 0, %s204
    %s206 = sphi 0, %s204
    %s207 = sphi 0, %s206
    %s221 = sphi 0, %s207
    %s225 = sphi 0, %s225
    %s227 = sphi 0, %s225
    %s228 = sphi 0, %s227
    %s242 = sphi 0, %s228
    %s250 = sphi 0, %s252
    %s253 = sphi 0, %s250
    %s254 = sphi 0, %s253
    %s270 = sphi 0, %s254
  $region4: #{qnet_forward.1} parent=0 // loop_header_branch
    %18 = sbr.rel (%p16) target = $region8
  $region5: #{qnet_forward.1} parent=0 // loop_body
    %s20 = ssub.s32 %s15, 1
    %s21 = ssub.s32 %s15, 2
    %s28 = sadd.s32 1, %s23
    %p29 = scmp.ge.s32.totalorder %s28, 3
    %s30 = scalar_select %p29, 0, %s28
    %s31 = sadd.s32 1, %s22
    %s32 = scalar_select %p29, %s31, %s22
    %p33 = scmp.ge.s32.totalorder %s32, 1
    %s34 = scalar_select %p33, 0, %s32
    %s35 = ssub.s32 %s22, %s34
    %p36 = scmp.eq.s32.totalorder %s35, 0
    %s38 = sadd.s32 %s37, 1
    %s39 = scalar_select %p36, %s37, %s38
    %p42 = pneg %p36
    %p43 = scmp.eq.s32.totalorder %s15, 2
    %p44 = por %p42, %p43
    %p45 = scmp.ne.s32.totalorder %s37, %s40
    %p46 = scmp.eq.s32.totalorder %s15, 0
    %p47 = por %p45, %p46
    %p48 = scmp.ne.s32.totalorder %s37, %s40
    %p49 = scmp.eq.s32.totalorder %s20, 2
    %p50 = por %p48, %p49
    %p51 = scmp.ne.s32.totalorder %s40, %s41
    %p52 = scmp.eq.s32.totalorder %s20, 0
    %p53 = por %p51, %p52
    %p54 = scmp.ne.s32.totalorder %s40, %s41
    %p55 = scmp.eq.s32.totalorder %s21, 2
    %p56 = por %p54, %p55
    %p58 = scmp.ne.s32.totalorder %s41, %s57
    %p59 = scmp.eq.s32.totalorder %s21, 0
    %p60 = por %p58, %p59
    %s61 = ssub.s32 %s23, %s30
    %s62 = ssub.s32 %s22, %s34
    %s63 = sor.u32 %s61, %s62
    %p64 = scmp.eq.s32.totalorder %s63, 0
    %s66 = sadd.s32 %s65, 1
    %s67 = scalar_select %p64, %s65, %s66
    %p70 = pneg %p64
    %p71 = scmp.eq.s32.totalorder %s15, 2
    %p72 = por %p70, %p71
    %p73 = scmp.ne.s32.totalorder %s65, %s68
    %p74 = scmp.eq.s32.totalorder %s15, 0
    %p75 = por %p73, %p74
    %p76 = scmp.ne.s32.totalorder %s65, %s68
    %p77 = scmp.eq.s32.totalorder %s20, 2
    %p78 = por %p76, %p77
    %p79 = scmp.ne.s32.totalorder %s68, %s69
    %p80 = scmp.eq.s32.totalorder %s20, 0
    %p81 = por %p79, %p80
    %p82 = scmp.ne.s32.totalorder %s68, %s69
    %p83 = scmp.eq.s32.totalorder %s21, 2
    %p84 = por %p82, %p83
    %p86 = scmp.ne.s32.totalorder %s69, %s85
    %p87 = scmp.eq.s32.totalorder %s21, 0
    %p88 = por %p86, %p87
    %s90 = sadd.s32 %s89, 1
    %p93 = scmp.eq.s32.totalorder %s15, 2
    %p94 = scmp.ne.s32.totalorder %s89, %s91
    %p95 = scmp.eq.s32.totalorder %s15, 0
    %p96 = por %p94, %p95
    %p97 = scmp.ne.s32.totalorder %s89, %s91
    %p98 = scmp.eq.s32.totalorder %s20, 2
    %p99 = por %p97, %p98
    %p100 = scmp.ne.s32.totalorder %s91, %s92
    %p101 = scmp.eq.s32.totalorder %s20, 0
    %p102 = por %p100, %p101
    %p103 = scmp.ne.s32.totalorder %s91, %s92
    %p104 = scmp.eq.s32.totalorder %s21, 2
    %p105 = por %p103, %p104
    %p107 = scmp.ne.s32.totalorder %s92, %s106
    %p108 = scmp.eq.s32.totalorder %s21, 0
    %p109 = por %p107, %p108
    %s110 = ssub.s32 %s23, %s30
    %p111 = scmp.eq.s32.totalorder %s110, 0
    %s113 = sadd.s32 %s112, 1
    %s114 = scalar_select %p111, %s112, %s113
    %p117 = pneg %p111
    %p118 = scmp.eq.s32.totalorder %s15, 2
    %p119 = por %p117, %p118
    %p120 = scmp.ne.s32.totalorder %s112, %s115
    %p121 = scmp.eq.s32.totalorder %s15, 0
    %p122 = por %p120, %p121
    %p123 = scmp.ne.s32.totalorder %s112, %s115
    %p124 = scmp.eq.s32.totalorder %s20, 2
    %p125 = por %p123, %p124
    %p126 = scmp.ne.s32.totalorder %s115, %s116
    %p127 = scmp.eq.s32.totalorder %s20, 0
    %p128 = por %p126, %p127
    %p129 = scmp.ne.s32.totalorder %s115, %s116
    %p130 = scmp.eq.s32.totalorder %s21, 2
    %p131 = por %p129, %p130
    %p133 = scmp.ne.s32.totalorder %s116, %s132
    %p134 = scmp.eq.s32.totalorder %s21, 0
    %p135 = por %p133, %p134
    %s136 = ssub.s32 %s23, %s30
    %p137 = scmp.eq.s32.totalorder %s136, 0
    %s139 = sadd.s32 %s138, 1
    %s140 = scalar_select %p137, %s138, %s139
    %p143 = pneg %p137
    %p144 = scmp.eq.s32.totalorder %s15, 2
    %p145 = por %p143, %p144
    %p146 = scmp.ne.s32.totalorder %s138, %s141
    %p147 = scmp.eq.s32.totalorder %s15, 0
    %p148 = por %p146, %p147
    %p149 = scmp.ne.s32.totalorder %s138, %s141
    %p150 = scmp.eq.s32.totalorder %s20, 2
    %p151 = por %p149, %p150
    %p152 = scmp.ne.s32.totalorder %s141, %s142
    %p153 = scmp.eq.s32.totalorder %s20, 0
    %p154 = por %p152, %p153
    %p155 = scmp.ne.s32.totalorder %s141, %s142
    %p156 = scmp.eq.s32.totalorder %s21, 2
    %p157 = por %p155, %p156
    %p159 = scmp.ne.s32.totalorder %s142, %s158
    %p160 = scmp.eq.s32.totalorder %s21, 0
    %p161 = por %p159, %p160
    %s163 = sadd.s32 %s162, 1
    %p166 = scmp.eq.s32.totalorder %s15, 2
    %p167 = scmp.ne.s32.totalorder %s162, %s164
    %p168 = scmp.eq.s32.totalorder %s15, 0
    %p169 = por %p167, %p168
    %p170 = scmp.ne.s32.totalorder %s162, %s164
    %p171 = scmp.eq.s32.totalorder %s20, 2
    %p172 = por %p170, %p171
    %p173 = scmp.ne.s32.totalorder %s164, %s165
    %p174 = scmp.eq.s32.totalorder %s20, 0
    %p175 = por %p173, %p174
    %p176 = scmp.ne.s32.totalorder %s164, %s165
    %p177 = scmp.eq.s32.totalorder %s21, 2
    %p178 = por %p176, %p177
    %p180 = scmp.ne.s32.totalorder %s165, %s179
    %p181 = scmp.eq.s32.totalorder %s21, 0
    %p182 = por %p180, %p181
    %s184 = sadd.s32 %s183, 1
    %p187 = scmp.eq.s32.totalorder %s15, 2
    %p188 = scmp.ne.s32.totalorder %s183, %s185
    %p189 = scmp.eq.s32.totalorder %s15, 0
    %p190 = por %p188, %p189
    %p191 = scmp.ne.s32.totalorder %s183, %s185
    %p192 = scmp.eq.s32.totalorder %s20, 2
    %p193 = por %p191, %p192
    %p194 = scmp.ne.s32.totalorder %s185, %s186
    %p195 = scmp.eq.s32.totalorder %s20, 0
    %p196 = por %p194, %p195
    %p197 = scmp.ne.s32.totalorder %s185, %s186
    %p198 = scmp.eq.s32.totalorder %s21, 2
    %p199 = por %p197, %p198
    %p201 = scmp.ne.s32.totalorder %s186, %s200
    %p202 = scmp.eq.s32.totalorder %s21, 0
    %p203 = por %p201, %p202
    %s205 = sadd.s32 %s204, 1
    %p208 = scmp.eq.s32.totalorder %s15, 2
    %p209 = scmp.ne.s32.totalorder %s204, %s206
    %p210 = scmp.eq.s32.totalorder %s15, 0
    %p211 = por %p209, %p210
    %p212 = scmp.ne.s32.totalorder %s204, %s206
    %p213 = scmp.eq.s32.totalorder %s20, 2
    %p214 = por %p212, %p213
    %p215 = scmp.ne.s32.totalorder %s206, %s207
    %p216 = scmp.eq.s32.totalorder %s20, 0
    %p217 = por %p215, %p216
    %p218 = scmp.ne.s32.totalorder %s206, %s207
    %p219 = scmp.eq.s32.totalorder %s21, 2
    %p220 = por %p218, %p219
    %p222 = scmp.ne.s32.totalorder %s207, %s221
    %p223 = scmp.eq.s32.totalorder %s21, 0
    %p224 = por %p222, %p223
    %s226 = sadd.s32 %s225, 1
    %p229 = scmp.eq.s32.totalorder %s15, 2
    %p230 = scmp.ne.s32.totalorder %s225, %s227
    %p231 = scmp.eq.s32.totalorder %s15, 0
    %p232 = por %p230, %p231
    %p233 = scmp.ne.s32.totalorder %s225, %s227
    %p234 = scmp.eq.s32.totalorder %s20, 2
    %p235 = por %p233, %p234
    %p236 = scmp.ne.s32.totalorder %s227, %s228
    %p237 = scmp.eq.s32.totalorder %s20, 0
    %p238 = por %p236, %p237
    %p239 = scmp.ne.s32.totalorder %s227, %s228
    %p240 = scmp.eq.s32.totalorder %s21, 2
    %p241 = por %p239, %p240
    %p243 = scmp.ne.s32.totalorder %s228, %s242
    %p244 = scmp.eq.s32.totalorder %s21, 0
    %p245 = por %p243, %p244
    %s246 = ssub.s32 %s23, %s30
    %s247 = ssub.s32 %s22, %s34
    %s248 = sor.u32 %s246, %s247
    %p249 = scmp.eq.s32.totalorder %s248, 0
    %s251 = sadd.s32 %s250, 1
    %s252 = scalar_select %p249, %s250, %s251
    %p255 = pneg %p249
    %p256 = scmp.eq.s32.totalorder %s15, 2
    %p257 = por %p255, %p256
    %p258 = scmp.ne.s32.totalorder %s250, %s253
    %p259 = scmp.eq.s32.totalorder %s15, 0
    %p260 = por %p258, %p259
    %p261 = scmp.ne.s32.totalorder %s250, %s253
    %p262 = scmp.eq.s32.totalorder %s20, 2
    %p263 = por %p261, %p262
    %p264 = scmp.ne.s32.totalorder %s253, %s254
    %p265 = scmp.eq.s32.totalorder %s20, 0
    %p266 = por %p264, %p265
    %p267 = scmp.ne.s32.totalorder %s253, %s254
    %p268 = scmp.eq.s32.totalorder %s21, 2
    %p269 = por %p267, %p268
    %p271 = scmp.ne.s32.totalorder %s254, %s270
    %p272 = scmp.eq.s32.totalorder %s21, 0
    %p273 = por %p271, %p272
    %p274 = scmp.le.s32.totalorder 1, %s15
    %p275 = scmp.lt.s32.totalorder %s15, 4
    %p276 = pnand %p274, %p275
    %p277 = pneg %p276
    // Predicated region
    $region9: #{qnet_forward.1} parent=5 // pred_check
      _
    $region10: #{qnet_forward.1} parent=5 // pred_check_branch
      %279 = sbr.rel (%p276) target = $region12
    $region11: #{qnet_forward.1} parent=5 // pred_region
      %s280 = ssub.s32 %s15, 1
      // Predicated region
      $region13: #{qnet_forward.1} parent=11 // pred_check
        %p281 = pneg %p53
      $region14: #{qnet_forward.1} parent=11 // pred_check_branch
        %283 = sbr.rel (%p281) target = $region16
      $region15: #{qnet_forward.1} parent=11 // pred_region
        %s284 = smul.u32 2, %s24
        %p285 = scmp.lt.s32.totalorder %s284, 1
        %s286 = scalar_select %p285, %s284, 1
        %s287 = smul.addr %s286, 8
        %s288 = scalar_lea.vmem %s0, %s287
        %s289 = smul.u32 2, %s24
      $region16: #{qnet_forward.1} parent=11 // pred_fallthru
        _
      // Predicated region
      $region17: #{qnet_forward.1} parent=11 // pred_check
        %p290 = pneg %p102
      $region18: #{qnet_forward.1} parent=11 // pred_check_branch
        %292 = sbr.rel (%p290) target = $region20
      $region19: #{qnet_forward.1} parent=11 // pred_region
        _
      $region20: #{qnet_forward.1} parent=11 // pred_fallthru
        _
      // Predicated region
      $region21: #{qnet_forward.1} parent=11 // pred_check
        %p293 = pneg %p175
      $region22: #{qnet_forward.1} parent=11 // pred_check_branch
        %295 = sbr.rel (%p293) target = $region24
      $region23: #{qnet_forward.1} parent=11 // pred_region
        _
      $region24: #{qnet_forward.1} parent=11 // pred_fallthru
        _
      // Predicated region
      $region25: #{qnet_forward.1} parent=11 // pred_check
        %p296 = pneg %p196
      $region26: #{qnet_forward.1} parent=11 // pred_check_branch
        %298 = sbr.rel (%p296) target = $region28
      $region27: #{qnet_forward.1} parent=11 // pred_region
        _
      $region28: #{qnet_forward.1} parent=11 // pred_fallthru
        _
      // Predicated region
      $region29: #{qnet_forward.1} parent=11 // pred_check
        %p299 = pneg %p217
      $region30: #{qnet_forward.1} parent=11 // pred_check_branch
        %301 = sbr.rel (%p299) target = $region32
      $region31: #{qnet_forward.1} parent=11 // pred_region
        _
      $region32: #{qnet_forward.1} parent=11 // pred_fallthru
        _
      // Predicated region
      $region33: #{qnet_forward.1} parent=11 // pred_check
        %p302 = pneg %p238
      $region34: #{qnet_forward.1} parent=11 // pred_check_branch
        %304 = sbr.rel (%p302) target = $region36
      $region35: #{qnet_forward.1} parent=11 // pred_region
        _
      $region36: #{qnet_forward.1} parent=11 // pred_fallthru
        _
    $region12: #{qnet_forward.1} parent=5 // pred_fallthru
      _
    %p305 = scmp.lt.s32.totalorder %s15, 3
    // Predicated region
    $region37: #{qnet_forward.1} parent=5 // pred_check
      %p306 = pneg %p305
    $region38: #{qnet_forward.1} parent=5 // pred_check_branch
      %308 = sbr.rel (%p306) target = $region40
    $region39: #{qnet_forward.1} parent=5 // pred_region
      // Predicated region
      $region41: #{qnet_forward.1} parent=39 // pred_check
        %p309 = pneg %p75
      $region42: #{qnet_forward.1} parent=39 // pred_check_branch
        %311 = sbr.rel (%p309) target = $region44
      $region43: #{qnet_forward.1} parent=39 // pred_region
        %s312 = smul.u32 2, %s22
        %p313 = scmp.lt.s32.totalorder %s23, 2
        %s314 = scalar_select %p313, %s23, 2
        %p315 = scmp.lt.s32.totalorder %s312, 1
        %s316 = scalar_select %p315, %s312, 1
        %s317 = smul.addr %s314, 2
        %s318 = sadd.s32 %s316, %s317
        %s319 = smul.addr %s318, 8
        %s320 = scalar_lea.vmem %s1, %s319
        %s321 = smul.u32 2, %s22
      $region44: #{qnet_forward.1} parent=39 // pred_fallthru
        _
      // Predicated region
      $region45: #{qnet_forward.1} parent=39 // pred_check
        %p322 = pneg %p122
      $region46: #{qnet_forward.1} parent=39 // pred_check_branch
        %324 = sbr.rel (%p322) target = $region48
      $region47: #{qnet_forward.1} parent=39 // pred_region
        %p325 = scmp.lt.s32.totalorder %s23, 2
        %s326 = scalar_select %p325, %s23, 2
        %s327 = smul.addr %s326, 2
        %s328 = smul.addr %s327, 8
        %s329 = scalar_lea.vmem %s3, %s328
      $region48: #{qnet_forward.1} parent=39 // pred_fallthru
        _
      // Predicated region
      $region49: #{qnet_forward.1} parent=39 // pred_check
        %p330 = pneg %p148
      $region50: #{qnet_forward.1} parent=39 // pred_check_branch
        %332 = sbr.rel (%p330) target = $region52
      $region51: #{qnet_forward.1} parent=39 // pred_region
        %p333 = scmp.lt.s32.totalorder %s23, 2
        %s334 = scalar_select %p333, %s23, 2
        %s335 = scalar_lea.vmem %s4, %s334
      $region52: #{qnet_forward.1} parent=39 // pred_fallthru
        _
    $region40: #{qnet_forward.1} parent=5 // pred_fallthru
      _
    %p336 = scmp.le.s32.totalorder 1, %s15
    %p337 = scmp.lt.s32.totalorder %s15, 4
    %p338 = pnand %p336, %p337
    %p339 = pneg %p338
    // Predicated region
    $region53: #{qnet_forward.1} parent=5 // pred_check
      _
    $region54: #{qnet_forward.1} parent=5 // pred_check_branch
      %341 = sbr.rel (%p338) target = $region56
    $region55: #{qnet_forward.1} parent=5 // pred_region
      %s342 = ssub.s32 %s15, 1
      %s343 = smul.u32 2, %s24
      %p344 = scmp.lt.s32.totalorder %s343, 1
      %s345 = scalar_select %p344, %s343, 1
      %s346 = smul.addr %s345, 8
      %s347 = scalar_lea.vmem %s0, %s346
      %p348 = pneg %p53
      %p349 = pneg %p50
      %s350 = smul.u32 2, %s24
      %p351 = scmp.lt.s32.totalorder %s25, 2
      %s352 = scalar_select %p351, %s25, 2
      %p353 = scmp.lt.s32.totalorder %s350, 1
      %s354 = scalar_select %p353, %s350, 1
      %s355 = smul.addr %s352, 2
      %s356 = sadd.s32 %s354, %s355
      %s357 = smul.addr %s356, 8
      %s358 = scalar_lea.vmem %s1, %s357
      %p359 = pneg %p81
      %p360 = pneg %p78
      %p361 = pneg %p102
      %p362 = pneg %p99
      %p363 = scmp.lt.s32.totalorder %s25, 2
      %s364 = scalar_select %p363, %s25, 2
      %s365 = smul.addr %s364, 2
      %s366 = smul.addr %s365, 8
      %s367 = scalar_lea.vmem %s3, %s366
      %p368 = pneg %p128
      %p369 = pneg %p125
      %p370 = scmp.lt.s32.totalorder %s25, 2
      %s371 = scalar_select %p370, %s25, 2
      %s372 = scalar_lea.vmem %s4, %s371
      %p373 = pneg %p154
      %p374 = pneg %p151
      %p375 = pneg %p175
      %p376 = pneg %p172
      %p377 = pneg %p196
      %p378 = pneg %p193
      %p379 = pneg %p217
      %p380 = pneg %p214
      %p381 = pneg %p238
      %p382 = pneg %p235
      %p383 = pneg %p266
      %p384 = pneg %p263
      %s385 = smul.u32 2, %s24
      %p386 = scmp.lt.s32.totalorder %s25, 2
      %s387 = scalar_select %p386, %s25, 2
      %p388 = scmp.lt.s32.totalorder %s385, 1
      %s389 = scalar_select %p388, %s385, 1
      %s390 = smul.addr %s387, 2
      %s391 = sadd.s32 %s389, %s390
      %s392 = smul.addr %s391, 8
      %s393 = scalar_lea.vmem %s9, %s392
      %s394 = smul.u32 2, %s24
      %p395 = scmp.lt.s32.totalorder %s394, 1
      %s396 = scalar_select %p395, %s394, 1
      %s397 = smul.addr %s396, 8
      %s398 = scalar_lea.vmem %s0, %s397
      %s399 = smul.u32 2, %s24
      %s400 = smul.u32 2, %s24
      %p401 = scmp.lt.s32.totalorder %s25, 2
      %s402 = scalar_select %p401, %s25, 2
      %p403 = scmp.lt.s32.totalorder %s400, 1
      %s404 = scalar_select %p403, %s400, 1
      %s405 = smul.addr %s402, 2
      %s406 = sadd.s32 %s404, %s405
      %s407 = smul.addr %s406, 8
      %s408 = scalar_lea.vmem %s1, %s407
      %s409 = smul.u32 2, %s24
      %p410 = scmp.lt.s32.totalorder %s25, 2
      %s411 = scalar_select %p410, %s25, 2
      %s412 = smul.addr %s411, 2
      %s413 = smul.addr %s412, 8
      %s414 = scalar_lea.vmem %s3, %s413
      %p415 = scmp.lt.s32.totalorder %s25, 2
      %s416 = scalar_select %p415, %s25, 2
      %s417 = scalar_lea.vmem %s4, %s416
      %s418 = smul.u32 2, %s24
      %p419 = scmp.lt.s32.totalorder %s25, 2
      %s420 = scalar_select %p419, %s25, 2
      %p421 = scmp.lt.s32.totalorder %s418, 1
      %s422 = scalar_select %p421, %s418, 1
      %s423 = smul.addr %s420, 2
      %s424 = sadd.s32 %s422, %s423
      %s425 = smul.addr %s424, 8
      %s426 = scalar_lea.vmem %s9, %s425
      %s427 = smul.u32 2, %s24
      %v428 = vld [vmem:[%s398] sm:$0xff]
      %v429 = vld [vmem:[%s398 + $0x8] sm:$0xff]
      %v430 = vld [vmem:[%s408] sm:$0xff]
      %v431 = vld [vmem:[%s408 + $0x8] sm:$0xff]
      %v432 = vld [vmem:[%s2] sm:$0xff]
      %v433 = vld [vmem:[%s2 + $0x8] sm:$0xff]
      %v434 = vld [vmem:[%s2 + $0x10] sm:$0xff]
      %v435 = vld [vmem:[%s2 + $0x18] sm:$0xff]
      %v436 = vld [vmem:[%s2 + $0x20] sm:$0xff]
      %v437 = vld [vmem:[%s2 + $0x28] sm:$0xff]
      %v438 = vld [vmem:[%s414] sm:$0xff]
      %v439 = vld [vmem:[%s414 + $0x8] sm:$0xff]
      %vm440 = vcmask 130048
      %v442 = vsel %vm440, %v430, 0
      %v445 = vsel %vm440, %v431, 0
      %447 = vmatpush.msra.mxu0 0.0
      %448 = vmatpush.msra.mxu0 0.0
      %449 = vmatpush.msra.mxu0 0.0
      %450 = vmatpush.msra.mxu0 0.0
      %451 = vmatpush.msra.mxu0 0.0
      %452 = vmatpush.msra.mxu0 0.0
      %453 = vmatpush.msra.mxu0 0.0
      %454 = vmatpush.msra.mxu0 0.0
      %455 = vmatpush.msra.mxu0 0.0
      %456 = vmatpush.msra.mxu0 0.0
      %457 = vmatpush.msra.mxu0 0.0
      %458 = vmatpush.msra.mxu0 0.0
      %459 = vmatpush.msra.mxu0 0.0
      %460 = vmatpush.msra.mxu0 0.0
      %461 = vmatpush.msra.mxu0 %v439
      %462 = vmatpush.msra.mxu0 %v438
      %463 = vmatmul.f32.gmra.mxu0 %v442
      %v464 = vpop.f32.mrf.mxu0
      %v465 = vadd.f32 0.0, %v464
      %466 = vmatmul.f32.gmra.mxu0 %v445
      %v467 = vpop.f32.mrf.mxu0
      %v468 = vadd.f32 0.0, %v467
      %469 = vdwg.mxu0
      %vm470 = vcmask 392192
      %v472 = vsel %vm470, %v428, 0
      %v475 = vsel %vm470, %v429, 0
      %477 = vmatpush.msra.mxu0 0.0
      %478 = vmatpush.msra.mxu0 0.0
      %479 = vmatpush.msra.mxu0 0.0
      %480 = vmatpush.msra.mxu0 0.0
      %481 = vmatpush.msra.mxu0 0.0
      %482 = vmatpush.msra.mxu0 0.0
      %483 = vmatpush.msra.mxu0 0.0
      %484 = vmatpush.msra.mxu0 0.0
      %485 = vmatpush.msra.mxu0 0.0
      %486 = vmatpush.msra.mxu0 0.0
      %487 = vmatpush.msra.mxu0 %v437
      %488 = vmatpush.msra.mxu0 %v436
      %489 = vmatpush.msra.mxu0 %v435
      %490 = vmatpush.msra.mxu0 %v434
      %491 = vmatpush.msra.mxu0 %v433
      %492 = vmatpush.msra.mxu0 %v432
      %493 = vmatmul.f32.gmra.mxu0 %v472
      %v494 = vpop.f32.mrf.mxu0
      %v495 = vadd.f32 %v465, %v494
      %496 = vmatmul.f32.gmra.mxu0 %v475
      %v497 = vpop.f32.mrf.mxu0
      %v498 = vadd.f32 %v468, %v497
      %499 = vdwg.mxu0
      %v500 = vld [vmem:[%s417] sm:$0x1]
      %v502 = vperm.slane %v500, 0
      %v504 = vadd.f32 %v495, %v502
      %v505 = vadd.f32 %v498, %v502
      %vm506 = vcmp.gt.f32.partialorder %v504, 0.0
      %vm507 = vcmp.gt.f32.partialorder %v505, 0.0
      %v508 = vmul.f32 %v504, 0.01
      %v509 = vmul.f32 %v505, 0.01
      %v510 = vsel %vm506, %v504, %v508
      %v511 = vsel %vm507, %v505, %v509
      %v512 = vld [vmem:[%s5] sm:$0xff]
      %v513 = vld [vmem:[%s5 + $0x8] sm:$0xff]
      %v514 = vld [vmem:[%s5 + $0x10] sm:$0xff]
      %v515 = vld [vmem:[%s5 + $0x18] sm:$0xff]
      %v516 = vld [vmem:[%s5 + $0x20] sm:$0xff]
      %v517 = vld [vmem:[%s5 + $0x28] sm:$0xff]
      %v518 = vld [vmem:[%s5 + $0x30] sm:$0xff]
      %v519 = vld [vmem:[%s5 + $0x38] sm:$0xff]
      %v520 = vld [vmem:[%s5 + $0x40] sm:$0xff]
      %v521 = vld [vmem:[%s5 + $0x48] sm:$0xff]
      %v522 = vld [vmem:[%s5 + $0x50] sm:$0xff]
      %v523 = vld [vmem:[%s5 + $0x58] sm:$0xff]
      %v524 = vld [vmem:[%s5 + $0x60] sm:$0xff]
      %v525 = vld [vmem:[%s5 + $0x68] sm:$0xff]
      %v526 = vld [vmem:[%s5 + $0x70] sm:$0xff]
      %v527 = vld [vmem:[%s5 + $0x78] sm:$0xff]
      %v528 = vld [vmem:[%s6] sm:$0x1]
      %v530 = vperm.slane %v528, 0
      %532 = vmatpush.msra.mxu0 %v527
      %533 = vmatpush.msra.mxu0 %v526
      %534 = vmatpush.msra.mxu0 %v525
      %535 = vmatpush.msra.mxu0 %v524
      %536 = vmatpush.msra.mxu0 %v523
      %537 = vmatpush.msra.mxu0 %v522
      %538 = vmatpush.msra.mxu0 %v521
      %539 = vmatpush.msra.mxu0 %v520
      %540 = vmatpush.msra.mxu0 %v519
      %541 = vmatpush.msra.mxu0 %v518
      %542 = vmatpush.msra.mxu0 %v517
      %543 = vmatpush.msra.mxu0 %v516
      %544 = vmatpush.msra.mxu0 %v515
      %545 = vmatpush.msra.mxu0 %v514
      %546 = vmatpush.msra.mxu0 %v513
      %547 = vmatpush.msra.mxu0 %v512
      %548 = vmatmul.f32.gmra.mxu0 %v510
      %v549 = vpop.f32.mrf.mxu0
      %v550 = vadd.f32 %v530, %v549
      %551 = vmatmul.f32.gmra.mxu0 %v511
      %v552 = vpop.f32.mrf.mxu0
      %v553 = vadd.f32 %v530, %v552
      %554 = vdwg.mxu0
      %vm555 = vcmp.gt.f32.partialorder %v550, 0.0
      %vm556 = vcmp.gt.f32.partialorder %v553, 0.0
      %v557 = vmul.f32 %v550, 0.01
      %v558 = vmul.f32 %v553, 0.01
      %v559 = vsel %vm555, %v550, %v557
      %v560 = vsel %vm556, %v553, %v558
      %v561 = vld [vmem:[%s7] sm:$0xff]
      %v562 = vld [vmem:[%s7 + $0x8] sm:$0xff]
      %v563 = vld [vmem:[%s7 + $0x10] sm:$0xff]
      %v564 = vld [vmem:[%s7 + $0x18] sm:$0xff]
      %v565 = vld [vmem:[%s7 + $0x20] sm:$0xff]
      %v566 = vld [vmem:[%s7 + $0x28] sm:$0xff]
      %v567 = vld [vmem:[%s7 + $0x30] sm:$0xff]
      %v568 = vld [vmem:[%s7 + $0x38] sm:$0xff]
      %v569 = vld [vmem:[%s7 + $0x40] sm:$0xff]
      %v570 = vld [vmem:[%s7 + $0x48] sm:$0xff]
      %v571 = vld [vmem:[%s7 + $0x50] sm:$0xff]
      %v572 = vld [vmem:[%s7 + $0x58] sm:$0xff]
      %v573 = vld [vmem:[%s7 + $0x60] sm:$0xff]
      %v574 = vld [vmem:[%s7 + $0x68] sm:$0xff]
      %v575 = vld [vmem:[%s7 + $0x70] sm:$0xff]
      %v576 = vld [vmem:[%s7 + $0x78] sm:$0xff]
      %v577 = vld [vmem:[%s8] sm:$0x1]
      %v579 = vperm.slane %v577, 0
      %581 = vmatpush.msra.mxu0 %v576
      %582 = vmatpush.msra.mxu0 %v575
      %583 = vmatpush.msra.mxu0 %v574
      %584 = vmatpush.msra.mxu0 %v573
      %585 = vmatpush.msra.mxu0 %v572
      %586 = vmatpush.msra.mxu0 %v571
      %587 = vmatpush.msra.mxu0 %v570
      %588 = vmatpush.msra.mxu0 %v569
      %589 = vmatpush.msra.mxu0 %v568
      %590 = vmatpush.msra.mxu0 %v567
      %591 = vmatpush.msra.mxu0 %v566
      %592 = vmatpush.msra.mxu0 %v565
      %593 = vmatpush.msra.mxu0 %v564
      %594 = vmatpush.msra.mxu0 %v563
      %595 = vmatpush.msra.mxu0 %v562
      %596 = vmatpush.msra.mxu0 %v561
      %597 = vmatmul.f32.gmra.mxu0 %v559
      %v598 = vpop.f32.mrf.mxu0
      %v599 = vadd.f32 %v579, %v598
      %600 = vmatmul.f32.gmra.mxu0 %v560
      %v601 = vpop.f32.mrf.mxu0
      %v602 = vadd.f32 %v579, %v601
      %603 = vdwg.mxu0
      %vm604 = vcmask 64512
      %605 = vst.msk [vmem:[%s426] sm:$0xff] %vm604, %v599
      %606 = vst.msk [vmem:[%s426 + $0x8] sm:$0xff] %vm604, %v602
      %s607 = smul.u32 2, %s24
      %p608 = scmp.lt.s32.totalorder %s25, 2
      %s609 = scalar_select %p608, %s25, 2
      %p610 = scmp.lt.s32.totalorder %s607, 1
      %s611 = scalar_select %p610, %s607, 1
      %s612 = smul.addr %s609, 2
      %s613 = sadd.s32 %s611, %s612
      %s614 = smul.addr %s613, 8
      %s615 = scalar_lea.vmem %s9, %s614
      // Predicated region
      $region57: #{qnet_forward.1} parent=55 // pred_check
        %p616 = pneg %p263
      $region58: #{qnet_forward.1} parent=55 // pred_check_branch
        %618 = sbr.rel (%p616) target = $region60
      $region59: #{qnet_forward.1} parent=55 // pred_region
        %s619 = smul.u32 2, %s24
      $region60: #{qnet_forward.1} parent=55 // pred_fallthru
        _
    $region56: #{qnet_forward.1} parent=5 // pred_fallthru
      _
    %p620 = scmp.le.s32.totalorder 2, %s15
    // Predicated region
    $region61: #{qnet_forward.1} parent=5 // pred_check
      %p621 = pneg %p620
    $region62: #{qnet_forward.1} parent=5 // pred_check_branch
      %623 = sbr.rel (%p621) target = $region64
    $region63: #{qnet_forward.1} parent=5 // pred_region
      %s624 = ssub.s32 %s15, 2
      // Predicated region
      $region65: #{qnet_forward.1} parent=63 // pred_check
        %p625 = pneg %p269
      $region66: #{qnet_forward.1} parent=63 // pred_check_branch
        %627 = sbr.rel (%p625) target = $region68
      $region67: #{qnet_forward.1} parent=63 // pred_region
        %s628 = smul.u32 2, %s26
        %p629 = scmp.lt.s32.totalorder %s27, 2
        %s630 = scalar_select %p629, %s27, 2
        %p631 = scmp.lt.s32.totalorder %s628, 1
        %s632 = scalar_select %p631, %s628, 1
        %s633 = smul.addr %s630, 2
        %s634 = sadd.s32 %s632, %s633
        %s635 = smul.addr %s634, 8
        %s636 = scalar_lea.vmem %s9, %s635
      $region68: #{qnet_forward.1} parent=63 // pred_fallthru
        _
    $region64: #{qnet_forward.1} parent=5 // pred_fallthru
      _
  $region6: #{qnet_forward.1} parent=0 // loop_footer
    %s19 = sadd.s32 1, %s15
  $region7: #{qnet_forward.1} parent=0 // loop_footer_branch
    %14 = sbr.rel target = $region3
  $region8: #{qnet_forward.1} parent=0 // loop_exit
    _

</llo_original>
